<compile_context>
chip_gen: v6e
topology: v6e:2x2x1
jax: 0.10.0
libtpu: 0.0.40
codegen_flags: <defaults>
</compile_context>

<pallas_src>
import math

import jax
import jax.numpy as jnp
from jax.experimental import pallas as pl
from jax.experimental.pallas import tpu as pltpu


_SINGLE_BLOCK_MAX_BYTES = 512 << 10   # below this: one block, no grid machinery
_PER_SAMPLE_MIN_BYTES = 1 << 20       # per-sample slab size needed for SMEM-scalar path
_MIN_TARGET_BLOCK_BYTES = 2 << 20     # floor of per-tile bytes when tiled
_MAX_TARGET_BLOCK_BYTES = 8 << 20     # ceiling (amortizes per-step overhead on v7x)
_VMEM_LIMIT_BYTES = 48 << 20          # 2x double-buffered 8 MiB in+out tiles + headroom


def _scale_rows_kernel(s_ref, x_ref, o_ref):
    """o = x * s, with s a (rows, 1) float32 per-row scale tile in VMEM."""
    # Keep the multiply in f32 (default promotion) for exact parity with the
    # f32 reference; bf16-packed multiply would only fill VALU slack anyway.
    o_ref[...] = (x_ref[...] * s_ref[...]).astype(o_ref.dtype)


def _scale_sample_kernel(s_ref, x_ref, o_ref):
    """o = x * s[b]; s is the full (B,) float32 per-sample scale vector in SMEM."""
    s = s_ref[pl.program_id(0)]          # cheap SMEM scalar read, splat over the tile
    o_ref[...] = (x_ref[...] * s).astype(o_ref.dtype)


def _pick_lane_width(n):
    """Largest lane-dense column width (multiple of 128) that divides n."""
    for cand in (512, 256, 128):
        if n % cand == 0:
            return cand
    return None


def _pick_target_block_bytes(total_bytes):
    """Per-tile byte target: 2-8 MiB, but keep >= ~8 grid steps so the pipeline
    can overlap fill/drain."""
    return int(max(_MIN_TARGET_BLOCK_BYTES,
                   min(_MAX_TARGET_BLOCK_BYTES, total_bytes // 8)))


def _pick_row_tile(total_rows, tc, dtype_bytes, target_bytes):
    """Sublane tile: multiple of 8, ~target_bytes per (tr, tc) tile.

    Prefer a divisor of total_rows (every tile dense, no masked stores), but only
    search down to max(tr // 2, 256): for awkward row counts one masked tail tile
    is far cheaper than collapsing to tiny tiles.
    """
    tr = (target_bytes // (tc * dtype_bytes)) // 8 * 8
    tr = max(8, min(tr, total_rows))
    if tr >= total_rows:
        return total_rows                       # single full-extent block
    lo = max(tr // 2, 256)
    for cand in range(tr, lo - 1, -8):
        if total_rows % cand == 0:
            return cand
    return tr   # no acceptable dense divisor: final partial tile is masked


def _compiler_params(num_grid_axes):
    return pltpu.CompilerParams(
        dimension_semantics=("parallel",) * num_grid_axes,
        vmem_limit_bytes=_VMEM_LIMIT_BYTES,
    )


def drop_path(x, drop_prob: float = 0.0, *, key=None, training: bool = False):
    """JAX/Pallas equivalent of the PyTorch drop_path function (forward)."""
    if drop_prob == 0.0 or not training:
        return x
    if not 0.0 < drop_prob < 1.0:
        raise ValueError(f"drop_prob must be in [0, 1); got {drop_prob}")
    if key is None:
        raise ValueError("drop_path needs a PRNG key when training with drop_prob > 0")

    keep_prob = 1.0 - drop_prob
    B = x.shape[0]
    N = math.prod(x.shape[1:]) if x.ndim > 1 else 1
    dtype_bytes = jnp.dtype(x.dtype).itemsize
    x_flat = x.reshape(B, N)

    # Per-sample Bernoulli(keep_prob) mask + rescale, always in float32.
    u = jax.random.uniform(key, (B,), dtype=jnp.float32)
    scale = jnp.floor(keep_prob + u) * (1.0 / keep_prob)        # (B,) f32

    total_bytes = B * N * dtype_bytes

    # --- Small slab: single block, no grid machinery --------------------------
    if total_bytes <= _SINGLE_BLOCK_MAX_BYTES:
        out_flat = pl.pallas_call(
            _scale_rows_kernel,
            out_shape=jax.ShapeDtypeStruct((B, N), x.dtype),
            grid=(1,),
            in_specs=[
                pl.BlockSpec((B, 1), lambda i: (0, 0)),
                pl.BlockSpec((B, N), lambda i: (0, 0)),
            ],
            out_specs=pl.BlockSpec((B, N), lambda i: (0, 0)),
            input_output_aliases={1: 0},
            compiler_params=_compiler_params(1),
        )(scale.reshape(B, 1), x_flat)
        return out_flat.reshape(x.shape)

    target_bytes = _pick_target_block_bytes(total_bytes)
    tc = _pick_lane_width(N)

    if tc is not None:
        rows_per_sample = N // tc
        per_sample_bytes = N * dtype_bytes

        # --- Main path: per-sample SMEM scalar scale, 2-D grid (sample, row-block)
        if per_sample_bytes >= _PER_SAMPLE_MIN_BYTES:
            x3 = x_flat.reshape(B, rows_per_sample, tc)     # free, contiguous reshape
            tr = _pick_row_tile(rows_per_sample, tc, dtype_bytes, target_bytes)
            grid = (B, pl.cdiv(rows_per_sample, tr))
            out3 = pl.pallas_call(
                _scale_sample_kernel,
                out_shape=jax.ShapeDtypeStruct((B, rows_per_sample, tc), x.dtype),
                grid=grid,
                in_specs=[
                    pl.BlockSpec(memory_space=pltpu.MemorySpace.SMEM),   # whole (B,) scale
                    pl.BlockSpec((1, tr, tc), lambda b, j: (b, j, 0)),
                ],
                out_specs=pl.BlockSpec((1, tr, tc), lambda b, j: (b, j, 0)),
                input_output_aliases={1: 0},
                compiler_params=_compiler_params(2),
            )(scale, x3)
            return out3.reshape(x.shape)

        # --- Many small samples: flat (total_rows, tc) slab, per-row VMEM scale
        total_rows = B * rows_per_sample
        x_slab = x_flat.reshape(total_rows, tc)
        scale_rows = jnp.broadcast_to(                      # tiny (total_rows, 1) f32
            scale.reshape(B, 1, 1), (B, rows_per_sample, 1)
        ).reshape(total_rows, 1)

        tr = _pick_row_tile(total_rows, tc, dtype_bytes, target_bytes)
        grid = (pl.cdiv(total_rows, tr),)
        out_slab = pl.pallas_call(
            _scale_rows_kernel,
            out_shape=jax.ShapeDtypeStruct((total_rows, tc), x.dtype),
            grid=grid,
            in_specs=[
                pl.BlockSpec((tr, 1), lambda j: (j, 0)),     # per-row scale
                pl.BlockSpec((tr, tc), lambda j: (j, 0)),    # input tile
            ],
            out_specs=pl.BlockSpec((tr, tc), lambda j: (j, 0)),
            input_output_aliases={1: 0},
            compiler_params=_compiler_params(1),
        )(scale_rows, x_slab)
        return out_slab.reshape(x.shape)

    # --- Fallback: N not a multiple of 128 ------------------------------------
    # Tile the (B, N) slab along features with a lane-aligned tile; the final tile
    # may be masked.  Avoids the extra HBM pass that padding would cost.
    # TODO(synk): if this path is ever hot with B < 8, fold a factor of 8 of N into
    # the sublane dim (or pad N once) to avoid sublane under-utilization.
    tn = (target_bytes // max(1, B * dtype_bytes)) // 128 * 128
    tn = min(N, max(128, tn))
    grid = (pl.cdiv(N, tn),)
    out_flat = pl.pallas_call(
        _scale_rows_kernel,
        out_shape=jax.ShapeDtypeStruct((B, N), x.dtype),
        grid=grid,
        in_specs=[
            pl.BlockSpec((B, 1), lambda j: (0, 0)),          # resident scale
            pl.BlockSpec((B, tn), lambda j: (0, j)),
        ],
        out_specs=pl.BlockSpec((B, tn), lambda j: (0, j)),
        input_output_aliases={1: 0},
        compiler_params=_compiler_params(1),
    )(scale.reshape(B, 1), x_flat)
    return out_flat.reshape(x.shape)


class DropPath:
    """Drop paths (Stochastic Depth) per sample (main path of residual blocks)."""

    def __init__(self, drop_prob=None):
        self.drop_prob = drop_prob if drop_prob is not None else 0.0
        self.training = True

    def __call__(self, x, key=None):
        return drop_path(x, self.drop_prob, key=key, training=self.training)


def _reference(x, keep_prob, key):
    u = jax.random.uniform(key, (x.shape[0],), dtype=jnp.float32)
    mask = jnp.floor(keep_prob + u).reshape((x.shape[0],) + (1,) * (x.ndim - 1))
    return x / keep_prob * mask


if __name__ == "__main__":
    root = jax.random.PRNGKey(0)
    keys = jax.random.split(root, 8)

    module = DropPath(drop_prob=0.25)
    keep_prob = 1.0 - module.drop_prob

    # ---- Small NCHW input (single-block path) --------------------------------
    x1 = jax.random.normal(keys[0], (2, 4, 16, 16), dtype=jnp.float32)
    y1 = jax.block_until_ready(module(x1, key=keys[1]))
    assert jnp.allclose(y1, _reference(x1, keep_prob, keys[1]), atol=1e-5, rtol=1e-5), \
        "single-block path mismatch"

    # ---- Larger input: per-sample SMEM-scalar tiled path ----------------------
    x2 = jax.random.normal(keys[2], (2, 32, 128, 128), dtype=jnp.float32)
    y2 = jax.block_until_ready(module(x2, key=keys[3]))
    assert jnp.allclose(y2, _reference(x2, keep_prob, keys[3]), atol=1e-5, rtol=1e-5), \
        "per-sample tiled path mismatch"

    # ---- Many small samples: per-row VMEM-scale path ---------------------------
    x3 = jax.random.normal(keys[4], (64, 8, 32, 32), dtype=jnp.float32)
    y3 = jax.block_until_ready(module(x3, key=keys[5]))
    assert jnp.allclose(y3, _reference(x3, keep_prob, keys[5]), atol=1e-5, rtol=1e-5), \
        "per-row tiled path mismatch"

    # ---- N not a multiple of 128: fallback feature-axis tiling ----------------
    x4 = jax.random.normal(keys[6], (8, 3, 100, 100), dtype=jnp.float32)
    y4 = jax.block_until_ready(module(x4, key=keys[7]))
    assert jnp.allclose(y4, _reference(x4, keep_prob, keys[7]), atol=1e-5, rtol=1e-5), \
        "fallback path mismatch"

    # ---- Eval path is identity ------------------------------------------------
    module.training = False
    y_eval = jax.block_until_ready(module(x1, key=keys[1]))
    assert jnp.allclose(y_eval, x1), "eval path must be identity"

    print("KERNEL_OK")
</pallas_src>

<mosaic_0001>
module attributes {stable_mosaic.version = 11 : i64} {
  func.func @_scale_rows_kernel(%arg0: i32, %arg1: memref<2x1xf32, #tpu.memory_space<vmem>>, %arg2: memref<2x1024xf32, #tpu.memory_space<vmem>>, %arg3: memref<2x1024xf32, #tpu.memory_space<vmem>>) attributes {dimension_semantics = [#tpu.dimension_semantics<parallel>], iteration_bounds = array<i64: 1>, scalar_prefetch = 0 : i64, scratch_operands = 0 : i64, tpu.core_type = #tpu.core_type<tc>, window_params = [{pipeline_mode = #tpu.pipeline_mode<synchronous>, transform_indices = @transform_0, window_bounds = array<i64: 2, 1>}, {pipeline_mode = #tpu.pipeline_mode<synchronous>, transform_indices = @transform_1, window_bounds = array<i64: 2, 1024>}, {pipeline_mode = #tpu.pipeline_mode<synchronous>, transform_indices = @transform_2, window_bounds = array<i64: 2, 1024>}]} {
    %c0 = arith.constant 0 : index
    %c0_0 = arith.constant 0 : index
    %0 = vector.load %arg2[%c0, %c0_0] : memref<2x1024xf32, #tpu.memory_space<vmem>>, vector<2x1024xf32>
    %c0_1 = arith.constant 0 : index
    %c0_2 = arith.constant 0 : index
    %1 = vector.load %arg1[%c0_1, %c0_2] : memref<2x1xf32, #tpu.memory_space<vmem>>, vector<2x1xf32>
    %2 = vector.broadcast %1 : vector<2x1xf32> to vector<2x1024xf32>
    %3 = arith.mulf %0, %2 : vector<2x1024xf32>
    %c0_3 = arith.constant 0 : index
    %c0_4 = arith.constant 0 : index
    %4 = vector.load %arg3[%c0_3, %c0_4] : memref<2x1024xf32, #tpu.memory_space<vmem>>, vector<2x1024xf32>
    tpu.vector_store %arg3[%c0_3, %c0_4], %3 {strides = array<i32>} : memref<2x1024xf32, #tpu.memory_space<vmem>>, vector<2x1024xf32>,
    return
  }
  func.func @transform_0(%arg0: i32) -> (i32, i32) {
    %c0_i32 = arith.constant 0 : i32
    %c0_i32_0 = arith.constant 0 : i32
    %c0_i32_1 = arith.constant 0 : i32
    return %c0_i32, %c0_i32_0 : i32, i32
  }
  func.func @transform_1(%arg0: i32) -> (i32, i32) {
    %c0_i32 = arith.constant 0 : i32
    %c0_i32_0 = arith.constant 0 : i32
    %c0_i32_1 = arith.constant 0 : i32
    return %c0_i32, %c0_i32_0 : i32, i32
  }
  func.func @transform_2(%arg0: i32) -> (i32, i32) {
    %c0_i32 = arith.constant 0 : i32
    %c0_i32_0 = arith.constant 0 : i32
    %c0_i32_1 = arith.constant 0 : i32
    return %c0_i32, %c0_i32_0 : i32, i32
  }
}

</mosaic_0001>

<llo_original>
// kernel: tpu_custom_call.1
$region0: #{tpu_custom_call.1}
  #allocation0 [shape = 'u32[]', space=smem, size = 0x4, offset = 0x4, fixed_abs, tag = 'smem constant byte address 0x4 - core index']
  #allocation1 [shape = 'u32[144,128]{1,0:T(1,128)}', space=vmem, size = 0x12000, scoped, tag = 'internal scratch']
  %s0 = inlined_call_operand.vmem [shape: f32[2,1], index: 0, kind: input, shape index: {}]
  %s1 = inlined_call_operand.hbm [shape: f32[2,1024], index: 1, kind: input, shape index: {}, may-alias: {1,2}]
  %s2 = inlined_call_operand.hbm [shape: f32[2,1024], index: 2, kind: output, shape index: {}, may-alias: {1,2}]
  %s3 = sld [smem:[#allocation0]]
  $region22: #{tpu_custom_call.1} parent=0
    _
  %s5 = ssub.s32 1, %s3
  %s6 = scalar_select 0, %s5, %s3
  $region1: #{tpu_custom_call.1} parent=0
    #allocation2 [shape = 'u8[8192]{0}', space=vmem, size = 0x2000, scoped, tag = 'input window, operand 1, single buffered']
    #allocation3 [shape = 's32[1]{0}', space=sflag, size = 0x4, scoped, tag = 'scoped memory for tpu_custom_call.1']
    #allocation4 [shape = 's32[1]{0}', space=sflag, size = 0x4, scoped, tag = 'scoped memory for tpu_custom_call.1']
    #allocation5 [shape = 'u8[8192]{0}', space=vmem, size = 0x2000, scoped, tag = 'output window, operand 0, single buffered']
    %7 = vsyncpa [#allocation3], 0
    %8 = vsyncpa [#allocation4], 0
    // Predicated region
    $region2: #{tpu_custom_call.1} parent=1 // pred_check
      _
    $region3: #{tpu_custom_call.1} parent=1 // pred_check_branch
      %10 = sbr.rel (0) target = $region5
    $region4: #{tpu_custom_call.1} parent=1 // pred_region
      _
    $region5: #{tpu_custom_call.1} parent=1 // pred_fallthru
      _
    // Predicated region
    $region6: #{tpu_custom_call.1} parent=1 // pred_check
      _
    $region7: #{tpu_custom_call.1} parent=1 // pred_check_branch
      %12 = sbr.rel (0) target = $region9
    $region8: #{tpu_custom_call.1} parent=1 // pred_region
      %s14 = ssub.s32 256, 256
      %15 = vsyncadd [#allocation3], %s14
      %s17 = sshll.u32 [#allocation2], 4
      %s18 = int_to_ptr.vmem [resolvable:$true] %s17
      %20 = dma.hbm_to_vmem [thread:$0]  %s1, 256, %s18, [#allocation3]
    $region9: #{tpu_custom_call.1} parent=1 // pred_fallthru
      _
    // Predicated region
    $region10: #{tpu_custom_call.1} parent=1 // pred_check
      _
    $region11: #{tpu_custom_call.1} parent=1 // pred_check_branch
      %22 = sbr.rel (0) target = $region13
    $region12: #{tpu_custom_call.1} parent=1 // pred_region
      %23 = dma.done [#allocation3], 256
    $region13: #{tpu_custom_call.1} parent=1 // pred_fallthru
      _
    %v24 = vld [vmem:[#allocation2] sm:$0xff]
    %v25 = vld [vmem:[#allocation2 + $0x8] sm:$0xff]
    %v26 = vld [vmem:[%s0] sm:$0x3]
    %28 = vset.pattern.permute.xlu0 0
    %29 = vperm.xlu0 %28, %v26
    %v30 = vpop.permute.xlu0 %29
    %v32 = vunpack.c.l.s4 269488144
    %v33 = vunpack.c.0.s8 %v32
    %v34 = vlaneseq
    %v35 = vshrl.u32 %v34, 7
    %v36 = vsub.s32 %v33, %v35
    %v37 = vrot.slane %v30, %v36
    %v39 = vmul.f32 %v24, %v37
    %v40 = vmul.f32 %v25, %v37
    %41 = vst [vmem:[#allocation5] sm:$0xff] %v39
    %42 = vst [vmem:[#allocation5 + $0x8] sm:$0xff] %v40
    // Predicated region
    $region14: #{tpu_custom_call.1} parent=1 // pred_check
      _
    $region15: #{tpu_custom_call.1} parent=1 // pred_check_branch
      %44 = sbr.rel (0) target = $region17
    $region16: #{tpu_custom_call.1} parent=1 // pred_region
      %s46 = ssub.s32 256, 256
      %47 = vsyncadd [#allocation4], %s46
      %s49 = sshll.u32 [#allocation5], 4
      %s50 = int_to_ptr.vmem [resolvable:$true] %s49
      %52 = dma.vmem_to_hbm [thread:$0]  %s50, 256, %s2, [#allocation4]
    $region17: #{tpu_custom_call.1} parent=1 // pred_fallthru
      _
    // Predicated region
    $region18: #{tpu_custom_call.1} parent=1 // pred_check
      _
    $region19: #{tpu_custom_call.1} parent=1 // pred_check_branch
      %54 = sbr.rel (0) target = $region21
    $region20: #{tpu_custom_call.1} parent=1 // pred_region
      %55 = dma.done [#allocation4], 256
    $region21: #{tpu_custom_call.1} parent=1 // pred_fallthru
      _
    %56 = vsyncpa [#allocation3], 1
    %57 = vsyncpa [#allocation4], 1

</llo_original>
